<compile_context>
chip_gen: v7x
topology: tpu7x:2x2x1
jax: 0.10.0
libtpu: 0.0.40
codegen_flags: <defaults>
</compile_context>

<pallas_src>
import jax
import jax.numpy as jnp
import numpy as np
from jax.experimental import pallas as pl
from jax.experimental.pallas import tpu as pltpu


# ---------------------------------------------------------------------------
# Weight packing (one-time cost; depends only on the conv weight and shapes).
# ---------------------------------------------------------------------------
def pack_sgem_weights(conv_weight, h, w, c, t):
    """Fold the grouped conv weight into ONE block-tridiagonal matmul matrix.

    conv_weight: (h*w, h, 3, 3)  -- nn.Conv2d(h*w, h*w, 3, padding=1, groups=w,
                                     bias=False) weight
    returns:     (t*c*h*w, t*c*h*w)

    Layout of the flattened activation (matches x.reshape(n, t*c*h*w)):
        row index = ti_in * cwh + ci_in * (h*w) + hi*w + wi
        col index = ti_out * cwh + ci_out * (h*w) + oc
    where oc is the conv output channel (group g = oc // h), and the module's
    (0,4,3,1,2) permute + the c/t zero-padding of the 3x3 conv are absorbed
    into the block-tridiagonal structure.
    """
    wh = h * w
    cwh = c * wh
    dtype = conv_weight.dtype

    # M[di, dj, ic2, oc] = conv_weight[oc, k, di, dj]  iff ic2 == k*w + oc//h
    wt = jnp.transpose(conv_weight, (2, 3, 1, 0))                 # (3, 3, h, wh)
    oc = jnp.arange(wh)
    k = jnp.arange(h)
    ic2_idx = k[:, None] * w + (oc[None, :] // h)                 # (h, wh)
    onehot = (jnp.arange(wh)[None, None, :] ==
              ic2_idx[:, :, None]).astype(dtype)                  # (h, wh, wh) [k, oc, ic2]
    M = jnp.einsum('xyko,koi->xyio', wt, onehot)                  # (3, 3, wh, wh) [di, dj, ic2, oc]

    # Block-tridiagonal over the c axis (absorbs the dj taps and the c-padding).
    ci = jnp.arange(c)
    djm = ci[:, None] - ci[None, :] + 1                           # (c_in, c_out)
    validc = ((djm >= 0) & (djm <= 2)).astype(dtype)
    djc = jnp.clip(djm, 0, 2)
    B = M[:, djc] * validc[None, :, :, None, None]                # (3, c_in, c_out, wh, wh)
    w3 = jnp.transpose(B, (0, 1, 3, 2, 4)).reshape(3, cwh, cwh)   # (3, cwh, cwh) [di, row, col]

    # Block-tridiagonal over the t axis (absorbs the di taps and the t-padding).
    # Output time to uses input time ti = to + di - 1  =>  di = ti - to + 1.
    ti = jnp.arange(t)
    dtm = ti[:, None] - ti[None, :] + 1                           # (t_in, t_out)
    validt = ((dtm >= 0) & (dtm <= 2)).astype(dtype)
    dtc = jnp.clip(dtm, 0, 2)
    WT = w3[dtc] * validt[:, :, None, None]                       # (t_in, t_out, cwh, cwh)
    w_full = jnp.transpose(WT, (0, 2, 1, 3)).reshape(t * cwh, t * cwh)
    return w_full


# ---------------------------------------------------------------------------
# Pallas kernel: one matmul, one full-tile store.
# ---------------------------------------------------------------------------
def _sgem_kernel(x_ref, w_ref, o_ref):
    # x_ref: (nb, t*cwh)          VMEM  -- batch block, fully flattened
    # w_ref: (t*cwh, t*cwh)       VMEM  -- resident block-tridiagonal weight
    # o_ref: (nb, t*cwh)          VMEM
    y = jnp.dot(x_ref[...], w_ref[...], preferred_element_type=jnp.float32)
    o_ref[...] = y.astype(o_ref.dtype)


def _make_sgem_call(n, tk, nb, dtype):
    itemsize = np.dtype(dtype).itemsize
    flops = 2 * n * tk * tk
    bytes_accessed = (2 * n * tk + tk * tk) * itemsize
    return pl.pallas_call(
        _sgem_kernel,
        out_shape=jax.ShapeDtypeStruct((n, tk), dtype),
        grid_spec=pltpu.PrefetchScalarGridSpec(
            num_scalar_prefetch=0,
            grid=(pl.cdiv(n, nb),),
            in_specs=[
                pl.BlockSpec((nb, tk), lambda b: (b, 0)),
                pl.BlockSpec((tk, tk), lambda b: (0, 0)),   # constant -> resident
            ],
            out_specs=pl.BlockSpec((nb, tk), lambda b: (b, 0)),
        ),
        compiler_params=pltpu.CompilerParams(
            dimension_semantics=("parallel",)),
        cost_estimate=pl.CostEstimate(
            flops=flops, transcendentals=0, bytes_accessed=bytes_accessed),
    )


@jax.jit
def sgem_forward(x, w_full):
    """SGEM forward.

    x:      (n, t, c, h, w)
    w_full: (t*c*h*w, t*c*h*w)  from pack_sgem_weights(conv_weight, h, w, c, t)
    returns: (n, t, c, h, w)
    """
    n, t, c, h, w = x.shape
    tk = t * c * h * w
    w_full = w_full.astype(x.dtype)                 # pin compute dtype
    xf = x.reshape(n, tk)                           # free reshape, no transpose
    nb = min(n, 128)                                # batch block (full n if small)
    y = _make_sgem_call(n, tk, nb, x.dtype)(xf, w_full)
    return y.reshape(n, t, c, h, w)                 # free reshape


def sgem_apply(x, conv_weight):
    """Convenience: pack weights + run (packing is a one-time cost in practice)."""
    _, t, c, h, w = x.shape
    return sgem_forward(x, pack_sgem_weights(conv_weight, h, w, c, t))


# ---------------------------------------------------------------------------
# Pure-JAX (XLA conv) reference of the module's forward pass.
# ---------------------------------------------------------------------------
def sgem_reference(x, conv_weight):
    n, t, c, h, w = x.shape
    xp = jnp.transpose(x, (0, 4, 3, 1, 2)).reshape(n, w * h, t, c)
    y = jax.lax.conv_general_dilated(
        xp, conv_weight, window_strides=(1, 1), padding=((1, 1), (1, 1)),
        dimension_numbers=("NCHW", "OIHW", "NCHW"), feature_group_count=w)
    y = y.reshape(n, h, w, t, c)
    return jnp.transpose(y, (0, 3, 4, 1, 2))


if __name__ == "__main__":
    # Small shapes consistent with the module's forward: x is (n, t, c, h, w)
    n, t, c, h, w = 2, 8, 4, 4, 4
    n_channels = c

    key = jax.random.PRNGKey(0)
    k_x, k_w1, k_w2 = jax.random.split(key, 3)

    x = jax.random.normal(k_x, (n, t, c, h, w), jnp.float32)

    # Deterministic init mimicking nn.Conv2d default scale: U(-1/sqrt(fan_in), +)
    fan_in1 = h * 3 * 3
    bound1 = 1.0 / np.sqrt(fan_in1)
    conv_w = jax.random.uniform(k_w1, (h * w, h, 3, 3), jnp.float32,
                                -bound1, bound1)

    # conv2d_2 exists in __init__ but is never used in forward(); kept for parity.
    fan_in2 = n_channels * 3 * 3
    bound2 = 1.0 / np.sqrt(fan_in2)
    _conv2_w = jax.random.uniform(k_w2, (n_channels, n_channels, 3, 3),
                                  jnp.float32, -bound2, bound2)

    # One-time weight packing, then the Pallas forward.
    w_full = jax.block_until_ready(pack_sgem_weights(conv_w, h, w, c, t))
    out = jax.block_until_ready(sgem_forward(x, w_full))
    assert out.shape == (n, t, c, h, w), out.shape

    ref = jax.block_until_ready(sgem_reference(x, conv_w))
    assert np.allclose(np.asarray(out), np.asarray(ref), rtol=1e-4, atol=1e-4), (
        "Pallas kernel output does not match reference")

    print("KERNEL_OK")
</pallas_src>

<mosaic_0001>
module attributes {stable_mosaic.version = 11 : i64} {
  func.func @_sgem_kernel(%arg0: i32, %arg1: memref<2x512xf32, #tpu.memory_space<vmem>>, %arg2: memref<512x512xf32, #tpu.memory_space<vmem>>, %arg3: memref<2x512xf32, #tpu.memory_space<vmem>>) attributes {dimension_semantics = [#tpu.dimension_semantics<parallel>], iteration_bounds = array<i64: 1>, scalar_prefetch = 0 : i64, scratch_operands = 0 : i64, tpu.core_type = #tpu.core_type<tc>, window_params = [{transform_indices = @transform_0, window_bounds = array<i64: 2, 512>}, {pipeline_mode = #tpu.pipeline_mode<synchronous>, transform_indices = @transform_1, window_bounds = array<i64: 512, 512>}, {transform_indices = @transform_2, window_bounds = array<i64: 2, 512>}]} {
    %c0 = arith.constant 0 : index
    %c0_0 = arith.constant 0 : index
    %0 = vector.load %arg1[%c0, %c0_0] : memref<2x512xf32, #tpu.memory_space<vmem>>, vector<2x512xf32>
    %c0_1 = arith.constant 0 : index
    %c0_2 = arith.constant 0 : index
    %1 = vector.load %arg2[%c0_1, %c0_2] : memref<512x512xf32, #tpu.memory_space<vmem>>, vector<512x512xf32>
    %cst = arith.constant dense<0.000000e+00> : vector<2x512xf32>
    %2 = tpu.matmul %0, %1, %cst {dimension_numbers = #tpu.dot_dimension_numbers<[1], [0], [0], [1], [0, 0, 1, 1], [], []>} : vector<2x512xf32>, vector<512x512xf32>, vector<2x512xf32> -> vector<2x512xf32>
    %c0_3 = arith.constant 0 : index
    %c0_4 = arith.constant 0 : index
    %3 = vector.load %arg3[%c0_3, %c0_4] : memref<2x512xf32, #tpu.memory_space<vmem>>, vector<2x512xf32>
    tpu.vector_store %arg3[%c0_3, %c0_4], %2 {strides = array<i32>} : memref<2x512xf32, #tpu.memory_space<vmem>>, vector<2x512xf32>,
    return
  }
  func.func @transform_0(%arg0: i32) -> (i32, i32) {
    %c0_i32 = arith.constant 0 : i32
    %c0_i32_0 = arith.constant 0 : i32
    return %arg0, %c0_i32 : i32, i32
  }
  func.func @transform_1(%arg0: i32) -> (i32, i32) {
    %c0_i32 = arith.constant 0 : i32
    %c0_i32_0 = arith.constant 0 : i32
    %c0_i32_1 = arith.constant 0 : i32
    return %c0_i32, %c0_i32_0 : i32, i32
  }
  func.func @transform_2(%arg0: i32) -> (i32, i32) {
    %c0_i32 = arith.constant 0 : i32
    %c0_i32_0 = arith.constant 0 : i32
    return %arg0, %c0_i32 : i32, i32
  }
}

</mosaic_0001>

<llo_original>
// kernel: sgem_forward.1
$region0: #{sgem_forward.1}
  #allocation0 [shape = 'u32[]', space=smem, size = 0x4, offset = 0x4, fixed_abs, tag = 'smem constant byte address 0x4 - core index']
  #allocation1 [shape = 'u32[144,128]{1,0:T(1,128)}', space=vmem, size = 0x12000, scoped, tag = 'internal scratch']
  %s0 = inlined_call_operand.vmem [shape: f32[2,512], index: 0, kind: input, shape index: {}]
  %s1 = inlined_call_operand.hbm [shape: f32[512,512], index: 1, kind: input, shape index: {}]
  %s2 = inlined_call_operand.vmem [shape: f32[2,512], index: 2, kind: output, shape index: {}]
  %s3 = sld [smem:[#allocation0]]
  $region22: #{sgem_forward.1} parent=0
    _
  %s5 = ssub.s32 1, %s3
  %s6 = scalar_select 0, %s5, %s3
  $region1: #{sgem_forward.1} parent=0
    #allocation2 [shape = 'u8[1048576]{0}', space=vmem, size = 0x100000, scoped, tag = 'input window, operand 1, single buffered']
    #allocation3 [shape = 's32[1]{0}', space=sflag, size = 0x4, scoped, tag = 'scoped memory for sgem_forward.1']
    %7 = vsyncpa [#allocation3], 0
    // Predicated region
    $region2: #{sgem_forward.1} parent=1 // pred_check
      _
    $region3: #{sgem_forward.1} parent=1 // pred_check_branch
      %9 = sbr.rel (0) target = $region5
    $region4: #{sgem_forward.1} parent=1 // pred_region
      _
    $region5: #{sgem_forward.1} parent=1 // pred_fallthru
      _
    // Predicated region
    $region6: #{sgem_forward.1} parent=1 // pred_check
      _
    $region7: #{sgem_forward.1} parent=1 // pred_check_branch
      %11 = sbr.rel (0) target = $region9
    $region8: #{sgem_forward.1} parent=1 // pred_region
      %s13 = ssub.s32 32768, 32768
      %14 = vsyncadd [#allocation3], %s13
      %s15 = sshll.u32 [#allocation2], 4
      %s16 = int_to_ptr.vmem [resolvable:$true] %s15
      %21 = dma.hbm_to_vmem [thread:$0]  %s1, 32768, %s16, [#allocation3], 512, 512, 32
    $region9: #{sgem_forward.1} parent=1 // pred_fallthru
      _
    // Predicated region
    $region10: #{sgem_forward.1} parent=1 // pred_check
      _
    $region11: #{sgem_forward.1} parent=1 // pred_check_branch
      %23 = sbr.rel (0) target = $region13
    $region12: #{sgem_forward.1} parent=1 // pred_region
      %24 = dma.done [#allocation3], 32768
    $region13: #{sgem_forward.1} parent=1 // pred_fallthru
      _
    %v25 = vld [vmem:[%s0] sm:$0xff]
    %v26 = vld [vmem:[#allocation2] sm:$0xff]
    %v27 = vld [vmem:[#allocation2 + $0x8] sm:$0xff]
    %v28 = vld [vmem:[#allocation2 + $0x10] sm:$0xff]
    %v29 = vld [vmem:[#allocation2 + $0x18] sm:$0xff]
    %v30 = vld [vmem:[#allocation2 + $0x20] sm:$0xff]
    %v31 = vld [vmem:[#allocation2 + $0x28] sm:$0xff]
    %v32 = vld [vmem:[#allocation2 + $0x30] sm:$0xff]
    %v33 = vld [vmem:[#allocation2 + $0x38] sm:$0xff]
    %v34 = vld [vmem:[#allocation2 + $0x40] sm:$0xff]
    %v35 = vld [vmem:[#allocation2 + $0x48] sm:$0xff]
    %v36 = vld [vmem:[#allocation2 + $0x50] sm:$0xff]
    %v37 = vld [vmem:[#allocation2 + $0x58] sm:$0xff]
    %v38 = vld [vmem:[#allocation2 + $0x60] sm:$0xff]
    %v39 = vld [vmem:[#allocation2 + $0x68] sm:$0xff]
    %v40 = vld [vmem:[#allocation2 + $0x70] sm:$0xff]
    %v41 = vld [vmem:[#allocation2 + $0x78] sm:$0xff]
    %v42 = vld [vmem:[#allocation2 + $0x80] sm:$0xff]
    %v43 = vld [vmem:[#allocation2 + $0x88] sm:$0xff]
    %v44 = vld [vmem:[#allocation2 + $0x90] sm:$0xff]
    %v45 = vld [vmem:[#allocation2 + $0x98] sm:$0xff]
    %v46 = vld [vmem:[#allocation2 + $0xa0] sm:$0xff]
    %v47 = vld [vmem:[#allocation2 + $0xa8] sm:$0xff]
    %v48 = vld [vmem:[#allocation2 + $0xb0] sm:$0xff]
    %v49 = vld [vmem:[#allocation2 + $0xb8] sm:$0xff]
    %v50 = vld [vmem:[#allocation2 + $0xc0] sm:$0xff]
    %v51 = vld [vmem:[#allocation2 + $0xc8] sm:$0xff]
    %v52 = vld [vmem:[#allocation2 + $0xd0] sm:$0xff]
    %v53 = vld [vmem:[#allocation2 + $0xd8] sm:$0xff]
    %v54 = vld [vmem:[#allocation2 + $0xe0] sm:$0xff]
    %v55 = vld [vmem:[#allocation2 + $0xe8] sm:$0xff]
    %v56 = vld [vmem:[#allocation2 + $0xf0] sm:$0xff]
    %v57 = vld [vmem:[#allocation2 + $0xf8] sm:$0xff]
    %v58 = vld [vmem:[#allocation2 + $0x100] sm:$0xff]
    %v59 = vld [vmem:[#allocation2 + $0x108] sm:$0xff]
    %v60 = vld [vmem:[#allocation2 + $0x110] sm:$0xff]
    %v61 = vld [vmem:[#allocation2 + $0x118] sm:$0xff]
    %v62 = vld [vmem:[#allocation2 + $0x120] sm:$0xff]
    %v63 = vld [vmem:[#allocation2 + $0x128] sm:$0xff]
    %v64 = vld [vmem:[#allocation2 + $0x130] sm:$0xff]
    %v65 = vld [vmem:[#allocation2 + $0x138] sm:$0xff]
    %v66 = vld [vmem:[#allocation2 + $0x140] sm:$0xff]
    %v67 = vld [vmem:[#allocation2 + $0x148] sm:$0xff]
    %v68 = vld [vmem:[#allocation2 + $0x150] sm:$0xff]
    %v69 = vld [vmem:[#allocation2 + $0x158] sm:$0xff]
    %v70 = vld [vmem:[#allocation2 + $0x160] sm:$0xff]
    %v71 = vld [vmem:[#allocation2 + $0x168] sm:$0xff]
    %v72 = vld [vmem:[#allocation2 + $0x170] sm:$0xff]
    %v73 = vld [vmem:[#allocation2 + $0x178] sm:$0xff]
    %v74 = vld [vmem:[#allocation2 + $0x180] sm:$0xff]
    %v75 = vld [vmem:[#allocation2 + $0x188] sm:$0xff]
    %v76 = vld [vmem:[#allocation2 + $0x190] sm:$0xff]
    %v77 = vld [vmem:[#allocation2 + $0x198] sm:$0xff]
    %v78 = vld [vmem:[#allocation2 + $0x1a0] sm:$0xff]
    %v79 = vld [vmem:[#allocation2 + $0x1a8] sm:$0xff]
    %v80 = vld [vmem:[#allocation2 + $0x1b0] sm:$0xff]
    %v81 = vld [vmem:[#allocation2 + $0x1b8] sm:$0xff]
    %v82 = vld [vmem:[#allocation2 + $0x1c0] sm:$0xff]
    %v83 = vld [vmem:[#allocation2 + $0x1c8] sm:$0xff]
    %v84 = vld [vmem:[#allocation2 + $0x1d0] sm:$0xff]
    %v85 = vld [vmem:[#allocation2 + $0x1d8] sm:$0xff]
    %v86 = vld [vmem:[#allocation2 + $0x1e0] sm:$0xff]
    %v87 = vld [vmem:[#allocation2 + $0x1e8] sm:$0xff]
    %v88 = vld [vmem:[#allocation2 + $0x1f0] sm:$0xff]
    %v89 = vld [vmem:[#allocation2 + $0x1f8] sm:$0xff]
    %v90 = vld [vmem:[#allocation2 + $0x200] sm:$0xff]
    %v91 = vld [vmem:[#allocation2 + $0x208] sm:$0xff]
    %v92 = vld [vmem:[#allocation2 + $0x210] sm:$0xff]
    %v93 = vld [vmem:[#allocation2 + $0x218] sm:$0xff]
    %v94 = vld [vmem:[#allocation2 + $0x220] sm:$0xff]
    %v95 = vld [vmem:[#allocation2 + $0x228] sm:$0xff]
    %v96 = vld [vmem:[#allocation2 + $0x230] sm:$0xff]
    %v97 = vld [vmem:[#allocation2 + $0x238] sm:$0xff]
    %v98 = vld [vmem:[#allocation2 + $0x240] sm:$0xff]
    %v99 = vld [vmem:[#allocation2 + $0x248] sm:$0xff]
    %v100 = vld [vmem:[#allocation2 + $0x250] sm:$0xff]
    %v101 = vld [vmem:[#allocation2 + $0x258] sm:$0xff]
    %v102 = vld [vmem:[#allocation2 + $0x260] sm:$0xff]
    %v103 = vld [vmem:[#allocation2 + $0x268] sm:$0xff]
    %v104 = vld [vmem:[#allocation2 + $0x270] sm:$0xff]
    %v105 = vld [vmem:[#allocation2 + $0x278] sm:$0xff]
    %v106 = vld [vmem:[#allocation2 + $0x280] sm:$0xff]
    %v107 = vld [vmem:[#allocation2 + $0x288] sm:$0xff]
    %v108 = vld [vmem:[#allocation2 + $0x290] sm:$0xff]
    %v109 = vld [vmem:[#allocation2 + $0x298] sm:$0xff]
    %v110 = vld [vmem:[#allocation2 + $0x2a0] sm:$0xff]
    %v111 = vld [vmem:[#allocation2 + $0x2a8] sm:$0xff]
    %v112 = vld [vmem:[#allocation2 + $0x2b0] sm:$0xff]
    %v113 = vld [vmem:[#allocation2 + $0x2b8] sm:$0xff]
    %v114 = vld [vmem:[#allocation2 + $0x2c0] sm:$0xff]
    %v115 = vld [vmem:[#allocation2 + $0x2c8] sm:$0xff]
    %v116 = vld [vmem:[#allocation2 + $0x2d0] sm:$0xff]
    %v117 = vld [vmem:[#allocation2 + $0x2d8] sm:$0xff]
    %v118 = vld [vmem:[#allocation2 + $0x2e0] sm:$0xff]
    %v119 = vld [vmem:[#allocation2 + $0x2e8] sm:$0xff]
    %v120 = vld [vmem:[#allocation2 + $0x2f0] sm:$0xff]
    %v121 = vld [vmem:[#allocation2 + $0x2f8] sm:$0xff]
    %v122 = vld [vmem:[#allocation2 + $0x300] sm:$0xff]
    %v123 = vld [vmem:[#allocation2 + $0x308] sm:$0xff]
    %v124 = vld [vmem:[#allocation2 + $0x310] sm:$0xff]
    %v125 = vld [vmem:[#allocation2 + $0x318] sm:$0xff]
    %v126 = vld [vmem:[#allocation2 + $0x320] sm:$0xff]
    %v127 = vld [vmem:[#allocation2 + $0x328] sm:$0xff]
    %v128 = vld [vmem:[#allocation2 + $0x330] sm:$0xff]
    %v129 = vld [vmem:[#allocation2 + $0x338] sm:$0xff]
    %v130 = vld [vmem:[#allocation2 + $0x340] sm:$0xff]
    %v131 = vld [vmem:[#allocation2 + $0x348] sm:$0xff]
    %v132 = vld [vmem:[#allocation2 + $0x350] sm:$0xff]
    %v133 = vld [vmem:[#allocation2 + $0x358] sm:$0xff]
    %v134 = vld [vmem:[#allocation2 + $0x360] sm:$0xff]
    %v135 = vld [vmem:[#allocation2 + $0x368] sm:$0xff]
    %v136 = vld [vmem:[#allocation2 + $0x370] sm:$0xff]
    %v137 = vld [vmem:[#allocation2 + $0x378] sm:$0xff]
    %v138 = vld [vmem:[#allocation2 + $0x380] sm:$0xff]
    %v139 = vld [vmem:[#allocation2 + $0x388] sm:$0xff]
    %v140 = vld [vmem:[#allocation2 + $0x390] sm:$0xff]
    %v141 = vld [vmem:[#allocation2 + $0x398] sm:$0xff]
    %v142 = vld [vmem:[#allocation2 + $0x3a0] sm:$0xff]
    %v143 = vld [vmem:[#allocation2 + $0x3a8] sm:$0xff]
    %v144 = vld [vmem:[#allocation2 + $0x3b0] sm:$0xff]
    %v145 = vld [vmem:[#allocation2 + $0x3b8] sm:$0xff]
    %v146 = vld [vmem:[#allocation2 + $0x3c0] sm:$0xff]
    %v147 = vld [vmem:[#allocation2 + $0x3c8] sm:$0xff]
    %v148 = vld [vmem:[#allocation2 + $0x3d0] sm:$0xff]
    %v149 = vld [vmem:[#allocation2 + $0x3d8] sm:$0xff]
    %v150 = vld [vmem:[#allocation2 + $0x3e0] sm:$0xff]
    %v151 = vld [vmem:[#allocation2 + $0x3e8] sm:$0xff]
    %v152 = vld [vmem:[#allocation2 + $0x3f0] sm:$0xff]
    %v153 = vld [vmem:[#allocation2 + $0x3f8] sm:$0xff]
    %v154 = vld [vmem:[#allocation2 + $0x400] sm:$0xff]
    %v155 = vld [vmem:[#allocation2 + $0x408] sm:$0xff]
    %v156 = vld [vmem:[#allocation2 + $0x410] sm:$0xff]
    %v157 = vld [vmem:[#allocation2 + $0x418] sm:$0xff]
    %v158 = vld [vmem:[#allocation2 + $0x420] sm:$0xff]
    %v159 = vld [vmem:[#allocation2 + $0x428] sm:$0xff]
    %v160 = vld [vmem:[#allocation2 + $0x430] sm:$0xff]
    %v161 = vld [vmem:[#allocation2 + $0x438] sm:$0xff]
    %v162 = vld [vmem:[#allocation2 + $0x440] sm:$0xff]
    %v163 = vld [vmem:[#allocation2 + $0x448] sm:$0xff]
    %v164 = vld [vmem:[#allocation2 + $0x450] sm:$0xff]
    %v165 = vld [vmem:[#allocation2 + $0x458] sm:$0xff]
    %v166 = vld [vmem:[#allocation2 + $0x460] sm:$0xff]
    %v167 = vld [vmem:[#allocation2 + $0x468] sm:$0xff]
    %v168 = vld [vmem:[#allocation2 + $0x470] sm:$0xff]
    %v169 = vld [vmem:[#allocation2 + $0x478] sm:$0xff]
    %v170 = vld [vmem:[#allocation2 + $0x480] sm:$0xff]
    %v171 = vld [vmem:[#allocation2 + $0x488] sm:$0xff]
    %v172 = vld [vmem:[#allocation2 + $0x490] sm:$0xff]
    %v173 = vld [vmem:[#allocation2 + $0x498] sm:$0xff]
    %v174 = vld [vmem:[#allocation2 + $0x4a0] sm:$0xff]
    %v175 = vld [vmem:[#allocation2 + $0x4a8] sm:$0xff]
    %v176 = vld [vmem:[#allocation2 + $0x4b0] sm:$0xff]
    %v177 = vld [vmem:[#allocation2 + $0x4b8] sm:$0xff]
    %v178 = vld [vmem:[#allocation2 + $0x4c0] sm:$0xff]
    %v179 = vld [vmem:[#allocation2 + $0x4c8] sm:$0xff]
    %v180 = vld [vmem:[#allocation2 + $0x4d0] sm:$0xff]
    %v181 = vld [vmem:[#allocation2 + $0x4d8] sm:$0xff]
    %v182 = vld [vmem:[#allocation2 + $0x4e0] sm:$0xff]
    %v183 = vld [vmem:[#allocation2 + $0x4e8] sm:$0xff]
    %v184 = vld [vmem:[#allocation2 + $0x4f0] sm:$0xff]
    %v185 = vld [vmem:[#allocation2 + $0x4f8] sm:$0xff]
    %v186 = vld [vmem:[#allocation2 + $0x500] sm:$0xff]
    %v187 = vld [vmem:[#allocation2 + $0x508] sm:$0xff]
    %v188 = vld [vmem:[#allocation2 + $0x510] sm:$0xff]
    %v189 = vld [vmem:[#allocation2 + $0x518] sm:$0xff]
    %v190 = vld [vmem:[#allocation2 + $0x520] sm:$0xff]
    %v191 = vld [vmem:[#allocation2 + $0x528] sm:$0xff]
    %v192 = vld [vmem:[#allocation2 + $0x530] sm:$0xff]
    %v193 = vld [vmem:[#allocation2 + $0x538] sm:$0xff]
    %v194 = vld [vmem:[#allocation2 + $0x540] sm:$0xff]
    %v195 = vld [vmem:[#allocation2 + $0x548] sm:$0xff]
    %v196 = vld [vmem:[#allocation2 + $0x550] sm:$0xff]
    %v197 = vld [vmem:[#allocation2 + $0x558] sm:$0xff]
    %v198 = vld [vmem:[#allocation2 + $0x560] sm:$0xff]
    %v199 = vld [vmem:[#allocation2 + $0x568] sm:$0xff]
    %v200 = vld [vmem:[#allocation2 + $0x570] sm:$0xff]
    %v201 = vld [vmem:[#allocation2 + $0x578] sm:$0xff]
    %v202 = vld [vmem:[#allocation2 + $0x580] sm:$0xff]
    %v203 = vld [vmem:[#allocation2 + $0x588] sm:$0xff]
    %v204 = vld [vmem:[#allocation2 + $0x590] sm:$0xff]
    %v205 = vld [vmem:[#allocation2 + $0x598] sm:$0xff]
    %v206 = vld [vmem:[#allocation2 + $0x5a0] sm:$0xff]
    %v207 = vld [vmem:[#allocation2 + $0x5a8] sm:$0xff]
    %v208 = vld [vmem:[#allocation2 + $0x5b0] sm:$0xff]
    %v209 = vld [vmem:[#allocation2 + $0x5b8] sm:$0xff]
    %v210 = vld [vmem:[#allocation2 + $0x5c0] sm:$0xff]
    %v211 = vld [vmem:[#allocation2 + $0x5c8] sm:$0xff]
    %v212 = vld [vmem:[#allocation2 + $0x5d0] sm:$0xff]
    %v213 = vld [vmem:[#allocation2 + $0x5d8] sm:$0xff]
    %v214 = vld [vmem:[#allocation2 + $0x5e0] sm:$0xff]
    %v215 = vld [vmem:[#allocation2 + $0x5e8] sm:$0xff]
    %v216 = vld [vmem:[#allocation2 + $0x5f0] sm:$0xff]
    %v217 = vld [vmem:[#allocation2 + $0x5f8] sm:$0xff]
    %v218 = vld [vmem:[#allocation2 + $0x600] sm:$0xff]
    %v219 = vld [vmem:[#allocation2 + $0x608] sm:$0xff]
    %v220 = vld [vmem:[#allocation2 + $0x610] sm:$0xff]
    %v221 = vld [vmem:[#allocation2 + $0x618] sm:$0xff]
    %v222 = vld [vmem:[#allocation2 + $0x620] sm:$0xff]
    %v223 = vld [vmem:[#allocation2 + $0x628] sm:$0xff]
    %v224 = vld [vmem:[#allocation2 + $0x630] sm:$0xff]
    %v225 = vld [vmem:[#allocation2 + $0x638] sm:$0xff]
    %v226 = vld [vmem:[#allocation2 + $0x640] sm:$0xff]
    %v227 = vld [vmem:[#allocation2 + $0x648] sm:$0xff]
    %v228 = vld [vmem:[#allocation2 + $0x650] sm:$0xff]
    %v229 = vld [vmem:[#allocation2 + $0x658] sm:$0xff]
    %v230 = vld [vmem:[#allocation2 + $0x660] sm:$0xff]
    %v231 = vld [vmem:[#allocation2 + $0x668] sm:$0xff]
    %v232 = vld [vmem:[#allocation2 + $0x670] sm:$0xff]
    %v233 = vld [vmem:[#allocation2 + $0x678] sm:$0xff]
    %v234 = vld [vmem:[#allocation2 + $0x680] sm:$0xff]
    %v235 = vld [vmem:[#allocation2 + $0x688] sm:$0xff]
    %v236 = vld [vmem:[#allocation2 + $0x690] sm:$0xff]
    %v237 = vld [vmem:[#allocation2 + $0x698] sm:$0xff]
    %v238 = vld [vmem:[#allocation2 + $0x6a0] sm:$0xff]
    %v239 = vld [vmem:[#allocation2 + $0x6a8] sm:$0xff]
    %v240 = vld [vmem:[#allocation2 + $0x6b0] sm:$0xff]
    %v241 = vld [vmem:[#allocation2 + $0x6b8] sm:$0xff]
    %v242 = vld [vmem:[#allocation2 + $0x6c0] sm:$0xff]
    %v243 = vld [vmem:[#allocation2 + $0x6c8] sm:$0xff]
    %v244 = vld [vmem:[#allocation2 + $0x6d0] sm:$0xff]
    %v245 = vld [vmem:[#allocation2 + $0x6d8] sm:$0xff]
    %v246 = vld [vmem:[#allocation2 + $0x6e0] sm:$0xff]
    %v247 = vld [vmem:[#allocation2 + $0x6e8] sm:$0xff]
    %v248 = vld [vmem:[#allocation2 + $0x6f0] sm:$0xff]
    %v249 = vld [vmem:[#allocation2 + $0x6f8] sm:$0xff]
    %v250 = vld [vmem:[#allocation2 + $0x700] sm:$0xff]
    %v251 = vld [vmem:[#allocation2 + $0x708] sm:$0xff]
    %v252 = vld [vmem:[#allocation2 + $0x710] sm:$0xff]
    %v253 = vld [vmem:[#allocation2 + $0x718] sm:$0xff]
    %v254 = vld [vmem:[#allocation2 + $0x720] sm:$0xff]
    %v255 = vld [vmem:[#allocation2 + $0x728] sm:$0xff]
    %v256 = vld [vmem:[#allocation2 + $0x730] sm:$0xff]
    %v257 = vld [vmem:[#allocation2 + $0x738] sm:$0xff]
    %v258 = vld [vmem:[#allocation2 + $0x740] sm:$0xff]
    %v259 = vld [vmem:[#allocation2 + $0x748] sm:$0xff]
    %v260 = vld [vmem:[#allocation2 + $0x750] sm:$0xff]
    %v261 = vld [vmem:[#allocation2 + $0x758] sm:$0xff]
    %v262 = vld [vmem:[#allocation2 + $0x760] sm:$0xff]
    %v263 = vld [vmem:[#allocation2 + $0x768] sm:$0xff]
    %v264 = vld [vmem:[#allocation2 + $0x770] sm:$0xff]
    %v265 = vld [vmem:[#allocation2 + $0x778] sm:$0xff]
    %v266 = vld [vmem:[#allocation2 + $0x780] sm:$0xff]
    %v267 = vld [vmem:[#allocation2 + $0x788] sm:$0xff]
    %v268 = vld [vmem:[#allocation2 + $0x790] sm:$0xff]
    %v269 = vld [vmem:[#allocation2 + $0x798] sm:$0xff]
    %v270 = vld [vmem:[#allocation2 + $0x7a0] sm:$0xff]
    %v271 = vld [vmem:[#allocation2 + $0x7a8] sm:$0xff]
    %v272 = vld [vmem:[#allocation2 + $0x7b0] sm:$0xff]
    %v273 = vld [vmem:[#allocation2 + $0x7b8] sm:$0xff]
    %v274 = vld [vmem:[#allocation2 + $0x7c0] sm:$0xff]
    %v275 = vld [vmem:[#allocation2 + $0x7c8] sm:$0xff]
    %v276 = vld [vmem:[#allocation2 + $0x7d0] sm:$0xff]
    %v277 = vld [vmem:[#allocation2 + $0x7d8] sm:$0xff]
    %v278 = vld [vmem:[#allocation2 + $0x7e0] sm:$0xff]
    %v279 = vld [vmem:[#allocation2 + $0x7e8] sm:$0xff]
    %v280 = vld [vmem:[#allocation2 + $0x7f0] sm:$0xff]
    %v281 = vld [vmem:[#allocation2 + $0x7f8] sm:$0xff]
    %v283 = vcombine.high %v25, %v25
    %v285 = vunpack.c.l.s4 1983009808
    %v286 = vunpack.c.0.s8 %v285
    %v287 = vlaneseq
    %v288 = vshrl.u32 %v287, 7
    %v289 = vsub.s32 %v286, %v288
    %v290 = vrot.slane %v25, %v289
    %v292 = vunpack.c.l.s4 1983009808
    %v293 = vunpack.c.0.s8 %v292
    %v294 = vlaneseq
    %v295 = vshrl.u32 %v294, 7
    %v296 = vsub.s32 %v293, %v295
    %v297 = vrot.slane %v283, %v296
    %v298 = vcombine.high %v290, %v290
    %v299 = vcombine.high %v297, %v297
    %304 = vmatprep.subr.mxu0 %v27
    %305 = vmatpush1.msra.mxu0 %v26
    %306 = vmatprep.subr.mxu0 %v31
    %307 = vmatpush1.msra.mxu0 %v30
    %308 = vmatprep.subr.mxu0 %v35
    %309 = vmatpush1.msra.mxu0 %v34
    %310 = vmatprep.subr.mxu0 %v39
    %311 = vmatpush1.msra.mxu0 %v38
    %312 = vmatprep.subr.mxu0 %v43
    %313 = vmatpush1.msra.mxu0 %v42
    %314 = vmatprep.subr.mxu0 %v47
    %315 = vmatpush1.msra.mxu0 %v46
    %316 = vmatprep.subr.mxu0 %v51
    %317 = vmatpush1.msra.mxu0 %v50
    %318 = vmatprep.subr.mxu0 %v55
    %319 = vmatpush1.msra.mxu0 %v54
    %320 = vmatprep.subr.mxu0 %v59
    %321 = vmatpush1.msra.mxu0 %v58
    %322 = vmatprep.subr.mxu0 %v63
    %323 = vmatpush1.msra.mxu0 %v62
    %324 = vmatprep.subr.mxu0 %v67
    %325 = vmatpush1.msra.mxu0 %v66
    %326 = vmatprep.subr.mxu0 %v71
    %327 = vmatpush1.msra.mxu0 %v70
    %328 = vmatprep.subr.mxu0 %v75
    %329 = vmatpush1.msra.mxu0 %v74
    %330 = vmatprep.subr.mxu0 %v79
    %331 = vmatpush1.msra.mxu0 %v78
    %332 = vmatprep.subr.mxu0 %v83
    %333 = vmatpush1.msra.mxu0 %v82
    %334 = vmatprep.subr.mxu0 %v87
    %335 = vmatpush1.msra.mxu0 %v86
    %336 = vmatprep.subr.mxu0 %v91
    %337 = vmatpush1.msra.mxu0 %v90
    %338 = vmatprep.subr.mxu0 %v95
    %339 = vmatpush1.msra.mxu0 %v94
    %340 = vmatprep.subr.mxu0 %v99
    %341 = vmatpush1.msra.mxu0 %v98
    %342 = vmatprep.subr.mxu0 %v103
    %343 = vmatpush1.msra.mxu0 %v102
    %344 = vmatprep.subr.mxu0 %v107
    %345 = vmatpush1.msra.mxu0 %v106
    %346 = vmatprep.subr.mxu0 %v111
    %347 = vmatpush1.msra.mxu0 %v110
    %348 = vmatprep.subr.mxu0 %v115
    %349 = vmatpush1.msra.mxu0 %v114
    %350 = vmatprep.subr.mxu0 %v119
    %351 = vmatpush1.msra.mxu0 %v118
    %352 = vmatprep.subr.mxu0 %v123
    %353 = vmatpush1.msra.mxu0 %v122
    %354 = vmatprep.subr.mxu0 %v127
    %355 = vmatpush1.msra.mxu0 %v126
    %356 = vmatprep.subr.mxu0 %v131
    %357 = vmatpush1.msra.mxu0 %v130
    %358 = vmatprep.subr.mxu0 %v135
    %359 = vmatpush1.msra.mxu0 %v134
    %360 = vmatprep.subr.mxu0 %v139
    %361 = vmatpush1.msra.mxu0 %v138
    %362 = vmatprep.subr.mxu0 %v143
    %363 = vmatpush1.msra.mxu0 %v142
    %364 = vmatprep.subr.mxu0 %v147
    %365 = vmatpush1.msra.mxu0 %v146
    %366 = vmatprep.subr.mxu0 %v151
    %367 = vmatpush1.msra.mxu0 %v150
    %368 = vmatprep.mubr.f32.mxu0 %v298
    %369 = vmatmul.mubr.f32.gmra.mrb[0].mxu0 %v290
    %v370 = vpop.f32.mrb[0].mxu0
    %v371 = vadd.f32 0.0, %v370
    %v372 = vpop.f32.mrb[0].mxu0
    %v373 = vadd.f32 0.0, %v372
    %374 = vdwg.mxu0
    %375 = vmatprep.subr.mxu0 %v155
    %376 = vmatpush1.msra.mxu0 %v154
    %377 = vmatprep.subr.mxu0 %v159
    %378 = vmatpush1.msra.mxu0 %v158
    %379 = vmatprep.subr.mxu0 %v163
    %380 = vmatpush1.msra.mxu0 %v162
    %381 = vmatprep.subr.mxu0 %v167
    %382 = vmatpush1.msra.mxu0 %v166
    %383 = vmatprep.subr.mxu0 %v171
    %384 = vmatpush1.msra.mxu0 %v170
    %385 = vmatprep.subr.mxu0 %v175
    %386 = vmatpush1.msra.mxu0 %v174
    %387 = vmatprep.subr.mxu0 %v179
    %388 = vmatpush1.msra.mxu0 %v178
    %389 = vmatprep.subr.mxu0 %v183
    %390 = vmatpush1.msra.mxu0 %v182
    %391 = vmatprep.subr.mxu0 %v187
    %392 = vmatpush1.msra.mxu0 %v186
    %393 = vmatprep.subr.mxu0 %v191
    %394 = vmatpush1.msra.mxu0 %v190
    %395 = vmatprep.subr.mxu0 %v195
    %396 = vmatpush1.msra.mxu0 %v194
    %397 = vmatprep.subr.mxu0 %v199
    %398 = vmatpush1.msra.mxu0 %v198
    %399 = vmatprep.subr.mxu0 %v203
    %400 = vmatpush1.msra.mxu0 %v202
    %401 = vmatprep.subr.mxu0 %v207
    %402 = vmatpush1.msra.mxu0 %v206
    %403 = vmatprep.subr.mxu0 %v211
    %404 = vmatpush1.msra.mxu0 %v210
    %405 = vmatprep.subr.mxu0 %v215
    %406 = vmatpush1.msra.mxu0 %v214
    %407 = vmatprep.subr.mxu0 %v219
    %408 = vmatpush1.msra.mxu0 %v218
    %409 = vmatprep.subr.mxu0 %v223
    %410 = vmatpush1.msra.mxu0 %v222
    %411 = vmatprep.subr.mxu0 %v227
    %412 = vmatpush1.msra.mxu0 %v226
    %413 = vmatprep.subr.mxu0 %v231
    %414 = vmatpush1.msra.mxu0 %v230
    %415 = vmatprep.subr.mxu0 %v235
    %416 = vmatpush1.msra.mxu0 %v234
    %417 = vmatprep.subr.mxu0 %v239
    %418 = vmatpush1.msra.mxu0 %v238
    %419 = vmatprep.subr.mxu0 %v243
    %420 = vmatpush1.msra.mxu0 %v242
    %421 = vmatprep.subr.mxu0 %v247
    %422 = vmatpush1.msra.mxu0 %v246
    %423 = vmatprep.subr.mxu0 %v251
    %424 = vmatpush1.msra.mxu0 %v250
    %425 = vmatprep.subr.mxu0 %v255
    %426 = vmatpush1.msra.mxu0 %v254
    %427 = vmatprep.subr.mxu0 %v259
    %428 = vmatpush1.msra.mxu0 %v258
    %429 = vmatprep.subr.mxu0 %v263
    %430 = vmatpush1.msra.mxu0 %v262
    %431 = vmatprep.subr.mxu0 %v267
    %432 = vmatpush1.msra.mxu0 %v266
    %433 = vmatprep.subr.mxu0 %v271
    %434 = vmatpush1.msra.mxu0 %v270
    %435 = vmatprep.subr.mxu0 %v275
    %436 = vmatpush1.msra.mxu0 %v274
    %437 = vmatprep.subr.mxu0 %v279
    %438 = vmatpush1.msra.mxu0 %v278
    %439 = vmatprep.mubr.f32.mxu0 %v299
    %440 = vmatmul.mubr.f32.gmra.mrb[0].mxu0 %v297
    %v441 = vpop.f32.mrb[0].mxu0
    %v442 = vadd.f32 %v371, %v441
    %v443 = vpop.f32.mrb[0].mxu0
    %v444 = vadd.f32 %v373, %v443
    %445 = vdwg.mxu0
    %446 = vmatprep.subr.mxu0 %v29
    %447 = vmatpush1.msra.mxu0 %v28
    %448 = vmatprep.subr.mxu0 %v33
    %449 = vmatpush1.msra.mxu0 %v32
    %450 = vmatprep.subr.mxu0 %v37
    %451 = vmatpush1.msra.mxu0 %v36
    %452 = vmatprep.subr.mxu0 %v41
    %453 = vmatpush1.msra.mxu0 %v40
    %454 = vmatprep.subr.mxu0 %v45
    %455 = vmatpush1.msra.mxu0 %v44
    %456 = vmatprep.subr.mxu0 %v49
    %457 = vmatpush1.msra.mxu0 %v48
    %458 = vmatprep.subr.mxu0 %v53
    %459 = vmatpush1.msra.mxu0 %v52
    %460 = vmatprep.subr.mxu0 %v57
    %461 = vmatpush1.msra.mxu0 %v56
    %462 = vmatprep.subr.mxu0 %v61
    %463 = vmatpush1.msra.mxu0 %v60
    %464 = vmatprep.subr.mxu0 %v65
    %465 = vmatpush1.msra.mxu0 %v64
    %466 = vmatprep.subr.mxu0 %v69
    %467 = vmatpush1.msra.mxu0 %v68
    %468 = vmatprep.subr.mxu0 %v73
    %469 = vmatpush1.msra.mxu0 %v72
    %470 = vmatprep.subr.mxu0 %v77
    %471 = vmatpush1.msra.mxu0 %v76
    %472 = vmatprep.subr.mxu0 %v81
    %473 = vmatpush1.msra.mxu0 %v80
    %474 = vmatprep.subr.mxu0 %v85
    %475 = vmatpush1.msra.mxu0 %v84
    %476 = vmatprep.subr.mxu0 %v89
    %477 = vmatpush1.msra.mxu0 %v88
    %478 = vmatprep.subr.mxu0 %v93
    %479 = vmatpush1.msra.mxu0 %v92
    %480 = vmatprep.subr.mxu0 %v97
    %481 = vmatpush1.msra.mxu0 %v96
    %482 = vmatprep.subr.mxu0 %v101
    %483 = vmatpush1.msra.mxu0 %v100
    %484 = vmatprep.subr.mxu0 %v105
    %485 = vmatpush1.msra.mxu0 %v104
    %486 = vmatprep.subr.mxu0 %v109
    %487 = vmatpush1.msra.mxu0 %v108
    %488 = vmatprep.subr.mxu0 %v113
    %489 = vmatpush1.msra.mxu0 %v112
    %490 = vmatprep.subr.mxu0 %v117
    %491 = vmatpush1.msra.mxu0 %v116
    %492 = vmatprep.subr.mxu0 %v121
    %493 = vmatpush1.msra.mxu0 %v120
    %494 = vmatprep.subr.mxu0 %v125
    %495 = vmatpush1.msra.mxu0 %v124
    %496 = vmatprep.subr.mxu0 %v129
    %497 = vmatpush1.msra.mxu0 %v128
    %498 = vmatprep.subr.mxu0 %v133
    %499 = vmatpush1.msra.mxu0 %v132
    %500 = vmatprep.subr.mxu0 %v137
    %501 = vmatpush1.msra.mxu0 %v136
    %502 = vmatprep.subr.mxu0 %v141
    %503 = vmatpush1.msra.mxu0 %v140
    %504 = vmatprep.subr.mxu0 %v145
    %505 = vmatpush1.msra.mxu0 %v144
    %506 = vmatprep.subr.mxu0 %v149
    %507 = vmatpush1.msra.mxu0 %v148
    %508 = vmatprep.subr.mxu0 %v153
    %509 = vmatpush1.msra.mxu0 %v152
    %510 = vmatprep.mubr.f32.mxu0 %v298
    %511 = vmatmul.mubr.f32.gmra.mrb[0].mxu0 %v290
    %v512 = vpop.f32.mrb[0].mxu0
    %v513 = vadd.f32 0.0, %v512
    %v514 = vpop.f32.mrb[0].mxu0
    %v515 = vadd.f32 0.0, %v514
    %516 = vdwg.mxu0
    %517 = vmatprep.subr.mxu0 %v157
    %518 = vmatpush1.msra.mxu0 %v156
    %519 = vmatprep.subr.mxu0 %v161
    %520 = vmatpush1.msra.mxu0 %v160
    %521 = vmatprep.subr.mxu0 %v165
    %522 = vmatpush1.msra.mxu0 %v164
    %523 = vmatprep.subr.mxu0 %v169
    %524 = vmatpush1.msra.mxu0 %v168
    %525 = vmatprep.subr.mxu0 %v173
    %526 = vmatpush1.msra.mxu0 %v172
    %527 = vmatprep.subr.mxu0 %v177
    %528 = vmatpush1.msra.mxu0 %v176
    %529 = vmatprep.subr.mxu0 %v181
    %530 = vmatpush1.msra.mxu0 %v180
    %531 = vmatprep.subr.mxu0 %v185
    %532 = vmatpush1.msra.mxu0 %v184
    %533 = vmatprep.subr.mxu0 %v189
    %534 = vmatpush1.msra.mxu0 %v188
    %535 = vmatprep.subr.mxu0 %v193
    %536 = vmatpush1.msra.mxu0 %v192
    %537 = vmatprep.subr.mxu0 %v197
    %538 = vmatpush1.msra.mxu0 %v196
    %539 = vmatprep.subr.mxu0 %v201
    %540 = vmatpush1.msra.mxu0 %v200
    %541 = vmatprep.subr.mxu0 %v205
    %542 = vmatpush1.msra.mxu0 %v204
    %543 = vmatprep.subr.mxu0 %v209
    %544 = vmatpush1.msra.mxu0 %v208
    %545 = vmatprep.subr.mxu0 %v213
    %546 = vmatpush1.msra.mxu0 %v212
    %547 = vmatprep.subr.mxu0 %v217
    %548 = vmatpush1.msra.mxu0 %v216
    %549 = vmatprep.subr.mxu0 %v221
    %550 = vmatpush1.msra.mxu0 %v220
    %551 = vmatprep.subr.mxu0 %v225
    %552 = vmatpush1.msra.mxu0 %v224
    %553 = vmatprep.subr.mxu0 %v229
    %554 = vmatpush1.msra.mxu0 %v228
    %555 = vmatprep.subr.mxu0 %v233
    %556 = vmatpush1.msra.mxu0 %v232
    %557 = vmatprep.subr.mxu0 %v237
    %558 = vmatpush1.msra.mxu0 %v236
    %559 = vmatprep.subr.mxu0 %v241
    %560 = vmatpush1.msra.mxu0 %v240
    %561 = vmatprep.subr.mxu0 %v245
    %562 = vmatpush1.msra.mxu0 %v244
    %563 = vmatprep.subr.mxu0 %v249
    %564 = vmatpush1.msra.mxu0 %v248
    %565 = vmatprep.subr.mxu0 %v253
    %566 = vmatpush1.msra.mxu0 %v252
    %567 = vmatprep.subr.mxu0 %v257
    %568 = vmatpush1.msra.mxu0 %v256
    %569 = vmatprep.subr.mxu0 %v261
    %570 = vmatpush1.msra.mxu0 %v260
    %571 = vmatprep.subr.mxu0 %v265
    %572 = vmatpush1.msra.mxu0 %v264
    %573 = vmatprep.subr.mxu0 %v269
    %574 = vmatpush1.msra.mxu0 %v268
    %575 = vmatprep.subr.mxu0 %v273
    %576 = vmatpush1.msra.mxu0 %v272
    %577 = vmatprep.subr.mxu0 %v277
    %578 = vmatpush1.msra.mxu0 %v276
    %579 = vmatprep.subr.mxu0 %v281
    %580 = vmatpush1.msra.mxu0 %v280
    %581 = vmatprep.mubr.f32.mxu0 %v299
    %582 = vmatmul.mubr.f32.gmra.mrb[0].mxu0 %v297
    %v583 = vpop.f32.mrb[0].mxu0
    %v584 = vadd.f32 %v513, %v583
    %v585 = vpop.f32.mrb[0].mxu0
    %v586 = vadd.f32 %v515, %v585
    %587 = vdwg.mxu0
    %v592 = vcombine.low %v442, %v444
    %v593 = vcombine.low %v584, %v586
    %v595 = vunpack.c.l.s4 1983009808
    %v596 = vunpack.c.0.s8 %v595
    %v597 = vlaneseq
    %v598 = vshrl.u32 %v597, 7
    %v599 = vsub.s32 %v596, %v598
    %v600 = vrot.slane %v592, %v599
    %v602 = vunpack.c.l.s4 1983009808
    %v603 = vunpack.c.0.s8 %v602
    %v604 = vlaneseq
    %v605 = vshrl.u32 %v604, 7
    %v606 = vsub.s32 %v603, %v605
    %v607 = vrot.slane %v593, %v606
    %v608 = vcombine.low %v600, %v607
    %610 = vst [vmem:[%s2] sm:$0xff] %v608
    // Predicated region
    $region14: #{sgem_forward.1} parent=1 // pred_check
      _
    $region15: #{sgem_forward.1} parent=1 // pred_check_branch
      %612 = sbr.rel (0) target = $region17
    $region16: #{sgem_forward.1} parent=1 // pred_region
      _
    $region17: #{sgem_forward.1} parent=1 // pred_fallthru
      _
    // Predicated region
    $region18: #{sgem_forward.1} parent=1 // pred_check
      _
    $region19: #{sgem_forward.1} parent=1 // pred_check_branch
      %614 = sbr.rel (0) target = $region21
    $region20: #{sgem_forward.1} parent=1 // pred_region
      _
    $region21: #{sgem_forward.1} parent=1 // pred_fallthru
      _
    %615 = vsyncpa [#allocation3], 1

</llo_original>
